<compile_context>
chip_gen: v5e
topology: v5e:2x2
jax: 0.10.0
libtpu: 0.0.40
codegen_flags: <defaults>
</compile_context>

<pallas_src>
import functools

import jax
import jax.numpy as jnp
from jax.experimental import pallas as pl
from jax.experimental.pallas import tpu as pltpu


def _round_up(a, b):
    return ((a + b - 1) // b) * b


def _frn_kernel(x_ref, g_ref, b_ref, eps_ref, o_ref, *, inv_hw):
    """One (tr, cols) block: FRN normalize + per-channel affine."""
    x = x_ref[...].astype(jnp.float32)                          # (tr, cols)
    # Mean of x^2 over the true H*W (block lane dim == full H*W, no padding).
    nu2 = jnp.sum(x * x, axis=-1, keepdims=True) * inv_hw       # (tr, 1)
    # Fold gamma into the per-row scale: one (tr,1) mul instead of per-element.
    s = g_ref[...] * jax.lax.rsqrt(nu2 + jnp.abs(eps_ref[0]))   # rsqrt -> EUP
    o_ref[...] = (x * s + b_ref[...]).astype(o_ref.dtype)


def frn_forward(x, gamma, beta, eps, *, vmem_tile_budget_bytes=16 * 1024 * 1024):
    """FRN forward. x: (B, C, H, W); gamma/beta: (1,C,1,1) or (C,); eps scalar."""
    B, C, H, W = x.shape
    dtype = x.dtype
    itemsize = jnp.dtype(dtype).itemsize
    rows, cols = B * C, H * W

    gamma = jnp.reshape(gamma, (C,)).astype(jnp.float32)
    beta = jnp.reshape(beta, (C,)).astype(jnp.float32)
    eps_arr = jnp.reshape(jnp.asarray(eps, jnp.float32), (1,))

    # Free reshape; no cast, no pad -> HBM traffic is exactly one read + one
    # write of the tensor in its native dtype.
    x2 = x.reshape(rows, cols)

    # Per-row affine params (row r -> channel r % C).  B*C floats: negligible
    # next to x, and it removes any tr % C requirement on the row tile.
    g_rows = jnp.tile(gamma, B).reshape(rows, 1)
    b_rows = jnp.tile(beta, B).reshape(rows, 1)

    # Sublane granularity of the row tile (packed dtypes need more sublanes).
    sub = max(8, 32 // itemsize)

    if rows <= sub:
        tr = rows  # full-dim block: exempt from the sublane-divisibility rule
    else:
        # Input + output tiles (double-buffered) + ~2 f32 working copies.
        bytes_per_row = cols * (4 * itemsize + 8)
        max_rows_budget = max(
            sub, (vmem_tile_budget_bytes // bytes_per_row) // sub * sub)
        # Cap at ~half the rows so the "parallel" axis has >= 2 grid steps
        # (lets v7x use both TensorCores); no effect on v5e/v6e (1 TC).
        half = _round_up(pl.cdiv(rows, 2), sub)
        tr = min(max_rows_budget, half)
    # TODO(synk): if a single `sub`-row tile ever exceeds the VMEM limit
    # (gigantic H*W), a two-pass reduction over a second "arbitrary" lane grid
    # axis with a (tr, 1) sum-of-squares accumulator would be needed.

    grid = (pl.cdiv(rows, tr),)
    out = pl.pallas_call(
        functools.partial(_frn_kernel, inv_hw=1.0 / float(cols)),
        out_shape=jax.ShapeDtypeStruct((rows, cols), dtype),
        grid=grid,
        in_specs=[
            pl.BlockSpec((tr, cols), lambda i: (i, 0)),
            pl.BlockSpec((tr, 1), lambda i: (i, 0)),
            pl.BlockSpec((tr, 1), lambda i: (i, 0)),
            pl.BlockSpec(memory_space=pltpu.MemorySpace.SMEM),
        ],
        out_specs=pl.BlockSpec((tr, cols), lambda i: (i, 0)),
        compiler_params=pltpu.CompilerParams(
            dimension_semantics=("parallel",),
            vmem_limit_bytes=48 * 1024 * 1024,  # safe on v7x's 64 MiB physical
        ),
    )(x2, g_rows, b_rows, eps_arr)

    return out.reshape(B, C, H, W)


def frn_reference(x, gamma, beta, eps):
    """Pure-JAX reference matching the PyTorch module exactly."""
    C = x.shape[1]
    nu2 = jnp.mean(jnp.square(x), axis=(2, 3), keepdims=True)
    xn = x * jax.lax.rsqrt(nu2 + jnp.abs(jnp.asarray(eps, jnp.float32)))
    return jnp.reshape(gamma, (1, C, 1, 1)) * xn + jnp.reshape(beta, (1, C, 1, 1))


if __name__ == "__main__":
    key = jax.random.PRNGKey(0)
    kx, kg, kb = jax.random.split(key, 3)

    B, C, H, W = 2, 4, 16, 16
    x = jax.random.normal(kx, (B, C, H, W), jnp.float32)
    # FRN.reset_parameters() gives weight=1, bias=0; perturb deterministically
    # so the affine path is actually exercised.
    gamma = 1.0 + 0.1 * jax.random.normal(kg, (1, C, 1, 1), jnp.float32)
    beta = 0.1 * jax.random.normal(kb, (1, C, 1, 1), jnp.float32)
    eps = jnp.float32(1e-6)

    y = jax.block_until_ready(frn_forward(x, gamma, beta, eps))
    assert y.shape == (B, C, H, W), y.shape
    assert bool(jnp.all(jnp.isfinite(y)))
    y_ref = frn_reference(x, gamma, beta, eps)
    assert bool(jnp.allclose(y, y_ref, atol=1e-5, rtol=1e-5)), float(
        jnp.max(jnp.abs(y - y_ref)))

    # Odd spatial size, rows < 8: full-dim (exempt) blocks, no host padding.
    x_odd = jax.random.normal(kx, (2, 3, 10, 10), jnp.float32)
    g_odd = 1.0 + 0.05 * jax.random.normal(kg, (1, 3, 1, 1), jnp.float32)
    b_odd = 0.05 * jax.random.normal(kb, (1, 3, 1, 1), jnp.float32)
    y_odd = jax.block_until_ready(frn_forward(x_odd, g_odd, b_odd, eps))
    assert bool(jnp.allclose(y_odd, frn_reference(x_odd, g_odd, b_odd, eps),
                             atol=1e-5, rtol=1e-5))

    # rows not a multiple of the row tile: exercises the partial tail block
    # (masked OOB reads/writes) and the >=2-step grid path.
    x_tail = jax.random.normal(kx, (3, 5, 12, 10), jnp.float32)
    g_tail = 1.0 + 0.05 * jax.random.normal(kg, (1, 5, 1, 1), jnp.float32)
    b_tail = 0.05 * jax.random.normal(kb, (1, 5, 1, 1), jnp.float32)
    y_tail = jax.block_until_ready(frn_forward(x_tail, g_tail, b_tail, eps))
    assert bool(jnp.allclose(y_tail, frn_reference(x_tail, g_tail, b_tail, eps),
                             atol=1e-5, rtol=1e-5))

    # bf16 datapath: HBM traffic stays in bf16 both ways, math in f32.
    x_bf = x.astype(jnp.bfloat16)
    y_bf = jax.block_until_ready(frn_forward(x_bf, gamma, beta, eps))
    assert y_bf.dtype == jnp.bfloat16
    y_bf_ref = frn_reference(x_bf.astype(jnp.float32), gamma, beta, eps)
    assert bool(jnp.allclose(y_bf.astype(jnp.float32), y_bf_ref,
                             atol=2e-2, rtol=2e-2))

    print("KERNEL_OK")
</pallas_src>

<mosaic_0001>
module attributes {stable_mosaic.version = 11 : i64} {
  func.func @_frn_kernel(%arg0: i32, %arg1: memref<8x256xf32, #tpu.memory_space<vmem>>, %arg2: memref<8x1xf32, #tpu.memory_space<vmem>>, %arg3: memref<8x1xf32, #tpu.memory_space<vmem>>, %arg4: memref<1xf32, #tpu.memory_space<smem>>, %arg5: memref<8x256xf32, #tpu.memory_space<vmem>>) attributes {dimension_semantics = [#tpu.dimension_semantics<parallel>], iteration_bounds = array<i64: 1>, scalar_prefetch = 0 : i64, scratch_operands = 0 : i64, tpu.core_type = #tpu.core_type<tc>, window_params = [{transform_indices = @transform_0, window_bounds = array<i64: 8, 256>}, {transform_indices = @transform_1, window_bounds = array<i64: 8, 1>}, {transform_indices = @transform_2, window_bounds = array<i64: 8, 1>}, {transform_indices = @transform_3, window_bounds = array<i64: 1>}, {transform_indices = @transform_4, window_bounds = array<i64: 8, 256>}]} {
    %c0 = arith.constant 0 : index
    %c0_0 = arith.constant 0 : index
    %0 = vector.load %arg1[%c0, %c0_0] : memref<8x256xf32, #tpu.memory_space<vmem>>, vector<8x256xf32>
    %1 = arith.mulf %0, %0 : vector<8x256xf32>
    %cst = arith.constant dense<0.000000e+00> : vector<8xf32>
    %2 = vector.multi_reduction <add>, %1, %cst [1] : vector<8x256xf32> to vector<8xf32>
    %3 = vector.shape_cast %2 : vector<8xf32> to vector<8x1xf32>
    %cst_1 = arith.constant 3.906250e-03 : f32
    %4 = vector.broadcast %cst_1 : f32 to vector<8x1xf32>
    %5 = arith.mulf %3, %4 : vector<8x1xf32>
    %c0_2 = arith.constant 0 : index
    %c0_3 = arith.constant 0 : index
    %6 = vector.load %arg2[%c0_2, %c0_3] : memref<8x1xf32, #tpu.memory_space<vmem>>, vector<8x1xf32>
    %c0_4 = arith.constant 0 : index
    %7 = memref.load %arg4[%c0_4] : memref<1xf32, #tpu.memory_space<smem>>
    %8 = math.absf %7 : f32
    %9 = vector.broadcast %8 : f32 to vector<8x1xf32>
    %10 = arith.addf %5, %9 : vector<8x1xf32>
    %11 = math.rsqrt %10 : vector<8x1xf32>
    %12 = arith.mulf %6, %11 : vector<8x1xf32>
    %13 = vector.broadcast %12 : vector<8x1xf32> to vector<8x256xf32>
    %14 = arith.mulf %0, %13 : vector<8x256xf32>
    %c0_5 = arith.constant 0 : index
    %c0_6 = arith.constant 0 : index
    %15 = vector.load %arg3[%c0_5, %c0_6] : memref<8x1xf32, #tpu.memory_space<vmem>>, vector<8x1xf32>
    %16 = vector.broadcast %15 : vector<8x1xf32> to vector<8x256xf32>
    %17 = arith.addf %14, %16 : vector<8x256xf32>
    %c0_7 = arith.constant 0 : index
    %c0_8 = arith.constant 0 : index
    %18 = vector.load %arg5[%c0_7, %c0_8] : memref<8x256xf32, #tpu.memory_space<vmem>>, vector<8x256xf32>
    tpu.vector_store %arg5[%c0_7, %c0_8], %17 {strides = array<i32>} : memref<8x256xf32, #tpu.memory_space<vmem>>, vector<8x256xf32>,
    return
  }
  func.func @transform_0(%arg0: i32) -> (i32, i32) {
    %c0_i32 = arith.constant 0 : i32
    %c0_i32_0 = arith.constant 0 : i32
    return %arg0, %c0_i32 : i32, i32
  }
  func.func @transform_1(%arg0: i32) -> (i32, i32) {
    %c0_i32 = arith.constant 0 : i32
    %c0_i32_0 = arith.constant 0 : i32
    return %arg0, %c0_i32 : i32, i32
  }
  func.func @transform_2(%arg0: i32) -> (i32, i32) {
    %c0_i32 = arith.constant 0 : i32
    %c0_i32_0 = arith.constant 0 : i32
    return %arg0, %c0_i32 : i32, i32
  }
  func.func @transform_3(%arg0: i32) -> i32 {
    %c0_i32 = arith.constant 0 : i32
    %c0_i32_0 = arith.constant 0 : i32
    return %c0_i32 : i32
  }
  func.func @transform_4(%arg0: i32) -> (i32, i32) {
    %c0_i32 = arith.constant 0 : i32
    %c0_i32_0 = arith.constant 0 : i32
    return %arg0, %c0_i32 : i32, i32
  }
}

</mosaic_0001>

<llo_original>
// kernel: tpu_custom_call.1
$region0: #{tpu_custom_call.1}
  #allocation0 [shape = 'u32[]', space=smem, size = 0x4, offset = 0x4, fixed_abs, tag = 'smem constant byte address 0x4 - core index']
  #allocation1 [shape = 'u32[72,128]{1,0:T(1,128)}', space=vmem, size = 0x9000, scoped, tag = 'internal scratch']
  #allocation2 [shape = 'f32[1]{0:T(128)S(6)}', space=smem, size = 0x200, scoped, tag = 'scoped memory for tpu_custom_call.1']
  %s0 = inlined_call_operand.vmem [shape: f32[8,256], index: 0, kind: input, shape index: {}]
  %s1 = inlined_call_operand.vmem [shape: f32[8,1], index: 1, kind: input, shape index: {}]
  %s2 = inlined_call_operand.vmem [shape: f32[8,1], index: 2, kind: input, shape index: {}]
  %s3 = inlined_call_operand.<no memory space> [shape: f32[1], index: 3, kind: input, shape index: {}]
  %s4 = inlined_call_operand.hbm [shape: f32[8,256], index: 4, kind: output, shape index: {}]
  %s5 = sld [smem:[#allocation0]]
  $region26: #{tpu_custom_call.1} parent=0
    _
  %s7 = ssub.s32 1, %s5
  %s8 = scalar_select 0, %s7, %s5
  %9 = sst [smem:[#allocation2]] %s3
  $region1: #{tpu_custom_call.1} parent=0
    #allocation3 [shape = 'u8[8192]{0}', space=vmem, size = 0x2000, scoped, tag = 'output window, operand 0, single buffered']
    #allocation4 [shape = 's32[1]{0}', space=sflag, size = 0x4, scoped, tag = 'scoped memory for tpu_custom_call.1']
    %10 = vsyncpa [#allocation4], 0
    // Predicated region
    $region2: #{tpu_custom_call.1} parent=1 // pred_check
      _
    $region3: #{tpu_custom_call.1} parent=1 // pred_check_branch
      %12 = sbr.rel (0) target = $region5
    $region4: #{tpu_custom_call.1} parent=1 // pred_region
      _
    $region5: #{tpu_custom_call.1} parent=1 // pred_fallthru
      _
    // Predicated region
    $region6: #{tpu_custom_call.1} parent=1 // pred_check
      _
    $region7: #{tpu_custom_call.1} parent=1 // pred_check_branch
      %14 = sbr.rel (0) target = $region9
    $region8: #{tpu_custom_call.1} parent=1 // pred_region
      _
    $region9: #{tpu_custom_call.1} parent=1 // pred_fallthru
      _
    // Predicated region
    $region10: #{tpu_custom_call.1} parent=1 // pred_check
      _
    $region11: #{tpu_custom_call.1} parent=1 // pred_check_branch
      %16 = sbr.rel (0) target = $region13
    $region12: #{tpu_custom_call.1} parent=1 // pred_region
      _
    $region13: #{tpu_custom_call.1} parent=1 // pred_fallthru
      _
    // Predicated region
    $region14: #{tpu_custom_call.1} parent=1 // pred_check
      _
    $region15: #{tpu_custom_call.1} parent=1 // pred_check_branch
      %18 = sbr.rel (0) target = $region17
    $region16: #{tpu_custom_call.1} parent=1 // pred_region
      _
    $region17: #{tpu_custom_call.1} parent=1 // pred_fallthru
      _
    %v19 = vld [vmem:[%s0] sm:$0xff]
    %v20 = vld [vmem:[%s0 + $0x8] sm:$0xff]
    %v21 = vmul.f32 %v19, %v19
    %v22 = vmul.f32 %v20, %v20
    %v23 = vadd.f32 %v21, %v22
    %24 = vadd.xlane.f32.xlu0 %v23
    %v25 = vpop.xlane.xlu0 %24
    %v26 = vmul.f32 %v25, 0.00390625
    %v27 = vld [vmem:[%s1] sm:$0xff]
    %s28 = sld [smem:[#allocation2]]
    %s29 = sand.u32 2147483647, %s28
    %v30 = vstv %s29
    %v31 = vadd.f32 %v26, %v30
    %v32 = vrsqrt.pop %v31
    %v33 = vmul.f32 %v32, %v31
    %v34 = vmul.f32 %v33, %v32
    %v35 = vmul.f32 0.5, %v34
    %v36 = vsub.f32 1.5, %v35
    %v37 = vmul.f32 %v32, %v36
    %vm38 = vweird.f32 %v31
    %vm39 = vweird.f32 %v32
    %vm40 = vmor %vm38, %vm39
    %v41 = vsel %vm40, %v32, %v37
    %v42 = vmul.f32 %v27, %v41
    %44 = vset.pattern.permute.xlu0 0
    %45 = vperm.xlu0 %44, %v42
    %v46 = vpop.permute.xlu0 %45
    %v48 = vmul.f32 %v19, %v46
    %v49 = vmul.f32 %v20, %v46
    %v50 = vld [vmem:[%s2] sm:$0xff]
    %52 = vset.pattern.permute.xlu0 0
    %53 = vperm.xlu0 %52, %v50
    %v54 = vpop.permute.xlu0 %53
    %v56 = vadd.f32 %v48, %v54
    %v57 = vadd.f32 %v49, %v54
    %58 = vst [vmem:[#allocation3] sm:$0xff] %v56
    %59 = vst [vmem:[#allocation3 + $0x8] sm:$0xff] %v57
    // Predicated region
    $region18: #{tpu_custom_call.1} parent=1 // pred_check
      _
    $region19: #{tpu_custom_call.1} parent=1 // pred_check_branch
      %61 = sbr.rel (0) target = $region21
    $region20: #{tpu_custom_call.1} parent=1 // pred_region
      %63 = vsyncadd [#allocation4], 0
      %s65 = sshll.u32 [#allocation3], 4
      %s66 = int_to_ptr.vmem [resolvable:$true] %s65
      %s67 = sshll.u32 %s4, 4
      %s68 = int_to_ptr.hbm [resolvable:$true] %s67
      %70 = dma.vmem_to_hbm [thread:$0]  %s66, 256, %s68, [#allocation4]
    $region21: #{tpu_custom_call.1} parent=1 // pred_fallthru
      _
    // Predicated region
    $region22: #{tpu_custom_call.1} parent=1 // pred_check
      _
    $region23: #{tpu_custom_call.1} parent=1 // pred_check_branch
      %72 = sbr.rel (0) target = $region25
    $region24: #{tpu_custom_call.1} parent=1 // pred_region
      %74 = dma.done [#allocation4], 256
    $region25: #{tpu_custom_call.1} parent=1 // pred_fallthru
      _
    %75 = vsyncpa [#allocation4], 1

</llo_original>
